<compile_context>
chip_gen: v7x
topology: tpu7x:2x2x1
jax: 0.10.0
libtpu: 0.0.40
codegen_flags: <defaults>
</compile_context>

<pallas_src>
import functools

import jax
import jax.numpy as jnp
from jax.experimental import pallas as pl
from jax.experimental.pallas import tpu as pltpu

NEG_SLOPE = 0.1   # LeakyReLU negative slope
LANE = 128        # TPU lane width
SUBLANE = 8       # TPU sublane width


def _round_up(x, m):
    return ((x + m - 1) // m) * m


def default_activation_dtype():
    """bf16 inter-layer activations on v6e/v7x; f32 on v5 (no bf16 VALU there)."""
    try:
        kind = jax.devices()[0].device_kind.lower()
    except Exception:
        return jnp.bfloat16
    if "v5" in kind:
        return jnp.float32
    return jnp.bfloat16


def mlp_kernel(x_ref, *refs, act_dtype):
    """Fused 7-layer MLP forward.

    refs = (w1, b1, w2, b2, ..., w7, b7, o_ref)
    Weights arrive as bf16, biases as f32.  Every matmul runs on the MXU with bf16
    operands and f32 accumulation; the bias add is done in f32, then activations are
    kept in `act_dtype` between layers.
    """
    o_ref = refs[-1]
    wb = refs[:-1]
    n_layers = len(wb) // 2

    h = x_ref[...]
    for li in range(n_layers):
        w = wb[2 * li][...]        # bf16 (in_i, out_i)
        b = wb[2 * li + 1][...]    # f32  (1, out_i)
        acc = jnp.dot(h.astype(jnp.bfloat16), w,
                      preferred_element_type=jnp.float32) + b   # f32 accumulate
        if li < n_layers - 1:
            h = acc.astype(act_dtype)
            # LeakyReLU(0.1) as a single VALU max (valid for slope < 1).
            h = jnp.maximum(h, NEG_SLOPE * h)
            # Dropout(p=0.3): identity in eval mode.
        else:
            o_ref[...] = acc.astype(o_ref.dtype)


def _pick_batch_tiling(B, cap):
    """Return (batch_tile, B_pad): pad only to a multiple of 8, keep the tile a
    divisor of B_pad, cap the tile, and give >=2 grid steps once B >= 256 so both
    v7x TensorCores get work."""
    B8 = _round_up(B, SUBLANE)
    min_steps = 2 if B8 >= 256 else 1
    steps = max(min_steps, -(-B8 // cap))            # ceil(B8 / cap)
    tile = _round_up(-(-B8 // steps), SUBLANE)       # round_up(ceil(B8/steps), 8) <= cap
    return tile, steps * tile


def mlp_forward(x, weights, biases, *, batch_tile_cap=512, act_dtype=None):
    """x: (B, input_size) f32. weights[i]: (in_i, out_i). biases[i]: (1, out_i)."""
    B, in_dim = x.shape
    n = len(weights)
    out_dim = weights[-1].shape[1]
    if act_dtype is None:
        act_dtype = default_activation_dtype()

    # ---- batch tiling ----
    batch_tile, B_pad = _pick_batch_tiling(B, batch_tile_cap)
    if B_pad != B:
        x = jnp.pad(x, ((0, B_pad - B), (0, 0)))

    # ---- weight/bias prep ----
    w_list = [jnp.asarray(w, jnp.float32) for w in weights]
    b_list = [jnp.asarray(b, jnp.float32).reshape(1, -1) for b in biases]
    # Pad every hidden width up to a multiple of 128 lanes (weights' columns, bias,
    # and the next layer's rows).  Zeros propagate exactly: 0 bias, LeakyReLU(0)=0,
    # zero rows contribute nothing to the next matmul.  The final out_dim stays
    # unpadded so the output store is only out_dim real columns.
    for i in range(n - 1):
        pad = (-w_list[i].shape[1]) % LANE
        if pad:
            w_list[i] = jnp.pad(w_list[i], ((0, 0), (0, pad)))
            b_list[i] = jnp.pad(b_list[i], ((0, 0), (0, pad)))
            w_list[i + 1] = jnp.pad(w_list[i + 1], ((0, pad), (0, 0)))
    # bf16 operands for the MXU; biases stay f32 for the f32 accumulate path.
    w_list = [w.astype(jnp.bfloat16) for w in w_list]

    # ---- specs ----
    def _row_map(i):
        return (i, 0)

    def _const_map(i):
        return (0, 0)

    in_specs = [pl.BlockSpec((batch_tile, in_dim), _row_map)]
    args = [x]
    for w, b in zip(w_list, b_list):
        # Weights/biases are tiny here (<300 KB bf16 total): full arrays resident
        # every step.  At large widths mark these pipeline_mode=pl.Buffered(1).
        in_specs.append(pl.BlockSpec(w.shape, _const_map))
        in_specs.append(pl.BlockSpec(b.shape, _const_map))
        args.append(w)
        args.append(b)

    # Unpadded output columns: block last dim == full array dim is legal, avoids
    # writing 128 padded f32 lanes per row and the wrapper column-slice pass.
    out_specs = pl.BlockSpec((batch_tile, out_dim), _row_map)

    out = pl.pallas_call(
        functools.partial(mlp_kernel, act_dtype=act_dtype),
        out_shape=jax.ShapeDtypeStruct((B_pad, out_dim), jnp.float32),
        grid_spec=pltpu.PrefetchScalarGridSpec(
            num_scalar_prefetch=0,
            grid=(B_pad // batch_tile,),
            in_specs=in_specs,
            out_specs=out_specs,
        ),
        compiler_params=pltpu.CompilerParams(
            dimension_semantics=("parallel",),
            vmem_limit_bytes=32 * 1024 * 1024,
        ),
    )(*args)

    return out if B_pad == B else out[:B]


def mlp_reference_matched(x, weights, biases, act_dtype):
    """Reference matching the kernel numerics: bf16 matmul operands, f32 accumulate
    and bias add, activations carried in act_dtype."""
    h = jnp.asarray(x, jnp.float32)
    n = len(weights)
    for i, (w, b) in enumerate(zip(weights, biases)):
        acc = jnp.dot(h.astype(jnp.bfloat16), w.astype(jnp.bfloat16),
                      preferred_element_type=jnp.float32) + b.reshape(1, -1).astype(jnp.float32)
        if i < n - 1:
            h = acc.astype(act_dtype)
            h = jnp.maximum(h, NEG_SLOPE * h)
        else:
            h = acc
    return h


def mlp_reference_f32(x, weights, biases):
    """Pure-f32 reference of the PyTorch module (eval mode)."""
    h = jnp.asarray(x, jnp.float32)
    n = len(weights)
    for i, (w, b) in enumerate(zip(weights, biases)):
        h = h @ w + b.reshape(1, -1)
        if i < n - 1:
            h = jnp.where(h >= 0.0, h, NEG_SLOPE * h)
    return h


if __name__ == "__main__":
    key = jax.random.PRNGKey(0)

    input_size = 32
    output_size = 10
    batch = 16

    # Layer widths implied by the PyTorch __init__.
    dims = [
        input_size,
        2 * input_size,
        4 * input_size,
        8 * input_size,
        4 * input_size,
        2 * input_size,
        input_size,
        output_size,
    ]

    # Deterministic init mimicking PyTorch Linear default: U(-1/sqrt(fan_in), +1/sqrt(fan_in)).
    # Stored directly as (in, out) — i.e. PyTorch's (out, in) weight, pre-transposed.
    weights, biases = [], []
    for li in range(len(dims) - 1):
        fan_in, fan_out = dims[li], dims[li + 1]
        key, kw, kb = jax.random.split(key, 3)
        bound = 1.0 / (fan_in ** 0.5)
        weights.append(
            jax.random.uniform(kw, (fan_in, fan_out), jnp.float32, -bound, bound)
        )
        biases.append(
            jax.random.uniform(kb, (1, fan_out), jnp.float32, -bound, bound)
        )

    key, kx = jax.random.split(key)
    x = jax.random.uniform(kx, (batch, input_size), jnp.float32, -1.0, 1.0)

    act_dtype = default_activation_dtype()

    out = mlp_forward(x, weights, biases, act_dtype=act_dtype)
    out = jax.block_until_ready(out)
    assert out.shape == (batch, output_size)

    # Tight check against a reference matched to the kernel's numerics.
    ref_matched = mlp_reference_matched(x, weights, biases, act_dtype)
    assert jnp.allclose(out, ref_matched, atol=2e-3, rtol=2e-3)

    # Loose sanity check against the pure-f32 PyTorch-equivalent forward.
    ref_f32 = mlp_reference_f32(x, weights, biases)
    assert jnp.allclose(out, ref_f32, atol=5e-2, rtol=5e-2)

    print("KERNEL_OK")
</pallas_src>

<mosaic_0001>
module attributes {stable_mosaic.version = 11 : i64} {
  func.func @mlp_kernel(%arg0: i32, %arg1: memref<16x32xf32, #tpu.memory_space<vmem>>, %arg2: memref<32x128xbf16, #tpu.memory_space<vmem>>, %arg3: memref<1x128xf32, #tpu.memory_space<vmem>>, %arg4: memref<128x128xbf16, #tpu.memory_space<vmem>>, %arg5: memref<1x128xf32, #tpu.memory_space<vmem>>, %arg6: memref<128x256xbf16, #tpu.memory_space<vmem>>, %arg7: memref<1x256xf32, #tpu.memory_space<vmem>>, %arg8: memref<256x128xbf16, #tpu.memory_space<vmem>>, %arg9: memref<1x128xf32, #tpu.memory_space<vmem>>, %arg10: memref<128x128xbf16, #tpu.memory_space<vmem>>, %arg11: memref<1x128xf32, #tpu.memory_space<vmem>>, %arg12: memref<128x128xbf16, #tpu.memory_space<vmem>>, %arg13: memref<1x128xf32, #tpu.memory_space<vmem>>, %arg14: memref<128x10xbf16, #tpu.memory_space<vmem>>, %arg15: memref<1x10xf32, #tpu.memory_space<vmem>>, %arg16: memref<16x10xf32, #tpu.memory_space<vmem>>) attributes {dimension_semantics = [#tpu.dimension_semantics<parallel>], iteration_bounds = array<i64: 1>, scalar_prefetch = 0 : i64, scratch_operands = 0 : i64, tpu.core_type = #tpu.core_type<tc>, window_params = [{transform_indices = @transform_0, window_bounds = array<i64: 16, 32>}, {pipeline_mode = #tpu.pipeline_mode<synchronous>, transform_indices = @transform_1, window_bounds = array<i64: 32, 128>}, {pipeline_mode = #tpu.pipeline_mode<synchronous>, transform_indices = @transform_2, window_bounds = array<i64: 1, 128>}, {pipeline_mode = #tpu.pipeline_mode<synchronous>, transform_indices = @transform_3, window_bounds = array<i64: 128, 128>}, {pipeline_mode = #tpu.pipeline_mode<synchronous>, transform_indices = @transform_4, window_bounds = array<i64: 1, 128>}, {pipeline_mode = #tpu.pipeline_mode<synchronous>, transform_indices = @transform_5, window_bounds = array<i64: 128, 256>}, {pipeline_mode = #tpu.pipeline_mode<synchronous>, transform_indices = @transform_6, window_bounds = array<i64: 1, 256>}, {pipeline_mode = #tpu.pipeline_mode<synchronous>, transform_indices = @transform_7, window_bounds = array<i64: 256, 128>}, {pipeline_mode = #tpu.pipeline_mode<synchronous>, transform_indices = @transform_8, window_bounds = array<i64: 1, 128>}, {pipeline_mode = #tpu.pipeline_mode<synchronous>, transform_indices = @transform_9, window_bounds = array<i64: 128, 128>}, {pipeline_mode = #tpu.pipeline_mode<synchronous>, transform_indices = @transform_10, window_bounds = array<i64: 1, 128>}, {pipeline_mode = #tpu.pipeline_mode<synchronous>, transform_indices = @transform_11, window_bounds = array<i64: 128, 128>}, {pipeline_mode = #tpu.pipeline_mode<synchronous>, transform_indices = @transform_12, window_bounds = array<i64: 1, 128>}, {pipeline_mode = #tpu.pipeline_mode<synchronous>, transform_indices = @transform_13, window_bounds = array<i64: 128, 10>}, {pipeline_mode = #tpu.pipeline_mode<synchronous>, transform_indices = @transform_14, window_bounds = array<i64: 1, 10>}, {transform_indices = @transform_15, window_bounds = array<i64: 16, 10>}]} {
    %c0 = arith.constant 0 : index
    %c0_0 = arith.constant 0 : index
    %0 = vector.load %arg1[%c0, %c0_0] : memref<16x32xf32, #tpu.memory_space<vmem>>, vector<16x32xf32>
    %c0_1 = arith.constant 0 : index
    %c0_2 = arith.constant 0 : index
    %1 = vector.load %arg2[%c0_1, %c0_2] : memref<32x128xbf16, #tpu.memory_space<vmem>>, vector<32x128xbf16>
    %c0_3 = arith.constant 0 : index
    %c0_4 = arith.constant 0 : index
    %2 = vector.load %arg3[%c0_3, %c0_4] : memref<1x128xf32, #tpu.memory_space<vmem>>, vector<1x128xf32>
    %3 = arith.truncf %0 : vector<16x32xf32> to vector<16x32xbf16>
    %cst = arith.constant dense<0.000000e+00> : vector<16x128xf32>
    %4 = tpu.matmul %3, %1, %cst {dimension_numbers = #tpu.dot_dimension_numbers<[1], [0], [0], [1], [0, 0, 1, 1], [], []>} : vector<16x32xbf16>, vector<32x128xbf16>, vector<16x128xf32> -> vector<16x128xf32>
    %5 = vector.broadcast %2 : vector<1x128xf32> to vector<16x128xf32>
    %6 = arith.addf %4, %5 : vector<16x128xf32>
    %7 = arith.truncf %6 : vector<16x128xf32> to vector<16x128xbf16>
    %cst_5 = arith.constant 1.000980e-01 : bf16
    %8 = vector.broadcast %cst_5 : bf16 to vector<16x128xbf16>
    %9 = arith.mulf %8, %7 : vector<16x128xbf16>
    %10 = arith.maximumf %7, %9 : vector<16x128xbf16>
    %c0_6 = arith.constant 0 : index
    %c0_7 = arith.constant 0 : index
    %11 = vector.load %arg4[%c0_6, %c0_7] : memref<128x128xbf16, #tpu.memory_space<vmem>>, vector<128x128xbf16>
    %c0_8 = arith.constant 0 : index
    %c0_9 = arith.constant 0 : index
    %12 = vector.load %arg5[%c0_8, %c0_9] : memref<1x128xf32, #tpu.memory_space<vmem>>, vector<1x128xf32>
    %cst_10 = arith.constant dense<0.000000e+00> : vector<16x128xf32>
    %13 = tpu.matmul %10, %11, %cst_10 {dimension_numbers = #tpu.dot_dimension_numbers<[1], [0], [0], [1], [0, 0, 1, 1], [], []>} : vector<16x128xbf16>, vector<128x128xbf16>, vector<16x128xf32> -> vector<16x128xf32>
    %14 = vector.broadcast %12 : vector<1x128xf32> to vector<16x128xf32>
    %15 = arith.addf %13, %14 : vector<16x128xf32>
    %16 = arith.truncf %15 : vector<16x128xf32> to vector<16x128xbf16>
    %cst_11 = arith.constant 1.000980e-01 : bf16
    %17 = vector.broadcast %cst_11 : bf16 to vector<16x128xbf16>
    %18 = arith.mulf %17, %16 : vector<16x128xbf16>
    %19 = arith.maximumf %16, %18 : vector<16x128xbf16>
    %c0_12 = arith.constant 0 : index
    %c0_13 = arith.constant 0 : index
    %20 = vector.load %arg6[%c0_12, %c0_13] : memref<128x256xbf16, #tpu.memory_space<vmem>>, vector<128x256xbf16>
    %c0_14 = arith.constant 0 : index
    %c0_15 = arith.constant 0 : index
    %21 = vector.load %arg7[%c0_14, %c0_15] : memref<1x256xf32, #tpu.memory_space<vmem>>, vector<1x256xf32>
    %cst_16 = arith.constant dense<0.000000e+00> : vector<16x256xf32>
    %22 = tpu.matmul %19, %20, %cst_16 {dimension_numbers = #tpu.dot_dimension_numbers<[1], [0], [0], [1], [0, 0, 1, 1], [], []>} : vector<16x128xbf16>, vector<128x256xbf16>, vector<16x256xf32> -> vector<16x256xf32>
    %23 = vector.broadcast %21 : vector<1x256xf32> to vector<16x256xf32>
    %24 = arith.addf %22, %23 : vector<16x256xf32>
    %25 = arith.truncf %24 : vector<16x256xf32> to vector<16x256xbf16>
    %cst_17 = arith.constant 1.000980e-01 : bf16
    %26 = vector.broadcast %cst_17 : bf16 to vector<16x256xbf16>
    %27 = arith.mulf %26, %25 : vector<16x256xbf16>
    %28 = arith.maximumf %25, %27 : vector<16x256xbf16>
    %c0_18 = arith.constant 0 : index
    %c0_19 = arith.constant 0 : index
    %29 = vector.load %arg8[%c0_18, %c0_19] : memref<256x128xbf16, #tpu.memory_space<vmem>>, vector<256x128xbf16>
    %c0_20 = arith.constant 0 : index
    %c0_21 = arith.constant 0 : index
    %30 = vector.load %arg9[%c0_20, %c0_21] : memref<1x128xf32, #tpu.memory_space<vmem>>, vector<1x128xf32>
    %cst_22 = arith.constant dense<0.000000e+00> : vector<16x128xf32>
    %31 = tpu.matmul %28, %29, %cst_22 {dimension_numbers = #tpu.dot_dimension_numbers<[1], [0], [0], [1], [0, 0, 1, 1], [], []>} : vector<16x256xbf16>, vector<256x128xbf16>, vector<16x128xf32> -> vector<16x128xf32>
    %32 = vector.broadcast %30 : vector<1x128xf32> to vector<16x128xf32>
    %33 = arith.addf %31, %32 : vector<16x128xf32>
    %34 = arith.truncf %33 : vector<16x128xf32> to vector<16x128xbf16>
    %cst_23 = arith.constant 1.000980e-01 : bf16
    %35 = vector.broadcast %cst_23 : bf16 to vector<16x128xbf16>
    %36 = arith.mulf %35, %34 : vector<16x128xbf16>
    %37 = arith.maximumf %34, %36 : vector<16x128xbf16>
    %c0_24 = arith.constant 0 : index
    %c0_25 = arith.constant 0 : index
    %38 = vector.load %arg10[%c0_24, %c0_25] : memref<128x128xbf16, #tpu.memory_space<vmem>>, vector<128x128xbf16>
    %c0_26 = arith.constant 0 : index
    %c0_27 = arith.constant 0 : index
    %39 = vector.load %arg11[%c0_26, %c0_27] : memref<1x128xf32, #tpu.memory_space<vmem>>, vector<1x128xf32>
    %cst_28 = arith.constant dense<0.000000e+00> : vector<16x128xf32>
    %40 = tpu.matmul %37, %38, %cst_28 {dimension_numbers = #tpu.dot_dimension_numbers<[1], [0], [0], [1], [0, 0, 1, 1], [], []>} : vector<16x128xbf16>, vector<128x128xbf16>, vector<16x128xf32> -> vector<16x128xf32>
    %41 = vector.broadcast %39 : vector<1x128xf32> to vector<16x128xf32>
    %42 = arith.addf %40, %41 : vector<16x128xf32>
    %43 = arith.truncf %42 : vector<16x128xf32> to vector<16x128xbf16>
    %cst_29 = arith.constant 1.000980e-01 : bf16
    %44 = vector.broadcast %cst_29 : bf16 to vector<16x128xbf16>
    %45 = arith.mulf %44, %43 : vector<16x128xbf16>
    %46 = arith.maximumf %43, %45 : vector<16x128xbf16>
    %c0_30 = arith.constant 0 : index
    %c0_31 = arith.constant 0 : index
    %47 = vector.load %arg12[%c0_30, %c0_31] : memref<128x128xbf16, #tpu.memory_space<vmem>>, vector<128x128xbf16>
    %c0_32 = arith.constant 0 : index
    %c0_33 = arith.constant 0 : index
    %48 = vector.load %arg13[%c0_32, %c0_33] : memref<1x128xf32, #tpu.memory_space<vmem>>, vector<1x128xf32>
    %cst_34 = arith.constant dense<0.000000e+00> : vector<16x128xf32>
    %49 = tpu.matmul %46, %47, %cst_34 {dimension_numbers = #tpu.dot_dimension_numbers<[1], [0], [0], [1], [0, 0, 1, 1], [], []>} : vector<16x128xbf16>, vector<128x128xbf16>, vector<16x128xf32> -> vector<16x128xf32>
    %50 = vector.broadcast %48 : vector<1x128xf32> to vector<16x128xf32>
    %51 = arith.addf %49, %50 : vector<16x128xf32>
    %52 = arith.truncf %51 : vector<16x128xf32> to vector<16x128xbf16>
    %cst_35 = arith.constant 1.000980e-01 : bf16
    %53 = vector.broadcast %cst_35 : bf16 to vector<16x128xbf16>
    %54 = arith.mulf %53, %52 : vector<16x128xbf16>
    %55 = arith.maximumf %52, %54 : vector<16x128xbf16>
    %c0_36 = arith.constant 0 : index
    %c0_37 = arith.constant 0 : index
    %56 = vector.load %arg14[%c0_36, %c0_37] : memref<128x10xbf16, #tpu.memory_space<vmem>>, vector<128x10xbf16>
    %c0_38 = arith.constant 0 : index
    %c0_39 = arith.constant 0 : index
    %57 = vector.load %arg15[%c0_38, %c0_39] : memref<1x10xf32, #tpu.memory_space<vmem>>, vector<1x10xf32>
    %cst_40 = arith.constant dense<0.000000e+00> : vector<16x10xf32>
    %58 = tpu.matmul %55, %56, %cst_40 {dimension_numbers = #tpu.dot_dimension_numbers<[1], [0], [0], [1], [0, 0, 1, 1], [], []>} : vector<16x128xbf16>, vector<128x10xbf16>, vector<16x10xf32> -> vector<16x10xf32>
    %59 = vector.broadcast %57 : vector<1x10xf32> to vector<16x10xf32>
    %60 = arith.addf %58, %59 : vector<16x10xf32>
    %c0_41 = arith.constant 0 : index
    %c0_42 = arith.constant 0 : index
    %61 = vector.load %arg16[%c0_41, %c0_42] : memref<16x10xf32, #tpu.memory_space<vmem>>, vector<16x10xf32>
    tpu.vector_store %arg16[%c0_41, %c0_42], %60 {strides = array<i32>} : memref<16x10xf32, #tpu.memory_space<vmem>>, vector<16x10xf32>,
    return
  }
  func.func @transform_0(%arg0: i32) -> (i32, i32) {
    %c0_i32 = arith.constant 0 : i32
    %c0_i32_0 = arith.constant 0 : i32
    return %arg0, %c0_i32 : i32, i32
  }
  func.func @transform_1(%arg0: i32) -> (i32, i32) {
    %c0_i32 = arith.constant 0 : i32
    %c0_i32_0 = arith.constant 0 : i32
    %c0_i32_1 = arith.constant 0 : i32
    return %c0_i32, %c0_i32_0 : i32, i32
  }
  func.func @transform_2(%arg0: i32) -> (i32, i32) {
    %c0_i32 = arith.constant 0 : i32
    %c0_i32_0 = arith.constant 0 : i32
    %c0_i32_1 = arith.constant 0 : i32
    return %c0_i32, %c0_i32_0 : i32, i32
  }
  func.func @transform_3(%arg0: i32) -> (i32, i32) {
    %c0_i32 = arith.constant 0 : i32
    %c0_i32_0 = arith.constant 0 : i32
    %c0_i32_1 = arith.constant 0 : i32
    return %c0_i32, %c0_i32_0 : i32, i32
  }
  func.func @transform_4(%arg0: i32) -> (i32, i32) {
    %c0_i32 = arith.constant 0 : i32
    %c0_i32_0 = arith.constant 0 : i32
    %c0_i32_1 = arith.constant 0 : i32
    return %c0_i32, %c0_i32_0 : i32, i32
  }
  func.func @transform_5(%arg0: i32) -> (i32, i32) {
    %c0_i32 = arith.constant 0 : i32
    %c0_i32_0 = arith.constant 0 : i32
    %c0_i32_1 = arith.constant 0 : i32
    return %c0_i32, %c0_i32_0 : i32, i32
  }
  func.func @transform_6(%arg0: i32) -> (i32, i32) {
    %c0_i32 = arith.constant 0 : i32
    %c0_i32_0 = arith.constant 0 : i32
    %c0_i32_1 = arith.constant 0 : i32
    return %c0_i32, %c0_i32_0 : i32, i32
  }
  func.func @transform_7(%arg0: i32) -> (i32, i32) {
    %c0_i32 = arith.constant 0 : i32
    %c0_i32_0 = arith.constant 0 : i32
    %c0_i32_1 = arith.constant 0 : i32
    return %c0_i32, %c0_i32_0 : i32, i32
  }
  func.func @transform_8(%arg0: i32) -> (i32, i32) {
    %c0_i32 = arith.constant 0 : i32
    %c0_i32_0 = arith.constant 0 : i32
    %c0_i32_1 = arith.constant 0 : i32
    return %c0_i32, %c0_i32_0 : i32, i32
  }
  func.func @transform_9(%arg0: i32) -> (i32, i32) {
    %c0_i32 = arith.constant 0 : i32
    %c0_i32_0 = arith.constant 0 : i32
    %c0_i32_1 = arith.constant 0 : i32
    return %c0_i32, %c0_i32_0 : i32, i32
  }
  func.func @transform_10(%arg0: i32) -> (i32, i32) {
    %c0_i32 = arith.constant 0 : i32
    %c0_i32_0 = arith.constant 0 : i32
    %c0_i32_1 = arith.constant 0 : i32
    return %c0_i32, %c0_i32_0 : i32, i32
  }
  func.func @transform_11(%arg0: i32) -> (i32, i32) {
    %c0_i32 = arith.constant 0 : i32
    %c0_i32_0 = arith.constant 0 : i32
    %c0_i32_1 = arith.constant 0 : i32
    return %c0_i32, %c0_i32_0 : i32, i32
  }
  func.func @transform_12(%arg0: i32) -> (i32, i32) {
    %c0_i32 = arith.constant 0 : i32
    %c0_i32_0 = arith.constant 0 : i32
    %c0_i32_1 = arith.constant 0 : i32
    return %c0_i32, %c0_i32_0 : i32, i32
  }
  func.func @transform_13(%arg0: i32) -> (i32, i32) {
    %c0_i32 = arith.constant 0 : i32
    %c0_i32_0 = arith.constant 0 : i32
    %c0_i32_1 = arith.constant 0 : i32
    return %c0_i32, %c0_i32_0 : i32, i32
  }
  func.func @transform_14(%arg0: i32) -> (i32, i32) {
    %c0_i32 = arith.constant 0 : i32
    %c0_i32_0 = arith.constant 0 : i32
    %c0_i32_1 = arith.constant 0 : i32
    return %c0_i32, %c0_i32_0 : i32, i32
  }
  func.func @transform_15(%arg0: i32) -> (i32, i32) {
    %c0_i32 = arith.constant 0 : i32
    %c0_i32_0 = arith.constant 0 : i32
    return %arg0, %c0_i32 : i32, i32
  }
}

</mosaic_0001>

<llo_original>
// kernel: tpu_custom_call.1
$region0: #{tpu_custom_call.1}
  #allocation0 [shape = 'u32[]', space=smem, size = 0x4, offset = 0x4, fixed_abs, tag = 'smem constant byte address 0x4 - core index']
  #allocation1 [shape = 'u32[144,128]{1,0:T(1,128)}', space=vmem, size = 0x12000, scoped, tag = 'internal scratch']
  %s0 = inlined_call_operand.vmem [shape: f32[16,32], index: 0, kind: input, shape index: {}]
  %s1 = inlined_call_operand.hbm [shape: bf16[32,128], index: 1, kind: input, shape index: {}]
  %s2 = inlined_call_operand.hbm [shape: f32[1,128], index: 2, kind: input, shape index: {}]
  %s3 = inlined_call_operand.vmem [shape: bf16[128,128], index: 3, kind: input, shape index: {}]
  %s4 = inlined_call_operand.hbm [shape: f32[1,128], index: 4, kind: input, shape index: {}]
  %s5 = inlined_call_operand.hbm [shape: bf16[128,256], index: 5, kind: input, shape index: {}]
  %s6 = inlined_call_operand.vmem [shape: f32[1,256], index: 6, kind: input, shape index: {}]
  %s7 = inlined_call_operand.hbm [shape: bf16[256,128], index: 7, kind: input, shape index: {}]
  %s8 = inlined_call_operand.vmem [shape: f32[1,128], index: 8, kind: input, shape index: {}]
  %s9 = inlined_call_operand.hbm [shape: bf16[128,128], index: 9, kind: input, shape index: {}]
  %s10 = inlined_call_operand.vmem [shape: f32[1,128], index: 10, kind: input, shape index: {}]
  %s11 = inlined_call_operand.hbm [shape: bf16[128,128], index: 11, kind: input, shape index: {}]
  %s12 = inlined_call_operand.vmem [shape: f32[1,128], index: 12, kind: input, shape index: {}]
  %s13 = inlined_call_operand.vmem [shape: bf16[128,10], index: 13, kind: input, shape index: {}]
  %s14 = inlined_call_operand.vmem [shape: f32[1,10], index: 14, kind: input, shape index: {}]
  %s15 = inlined_call_operand.hbm [shape: f32[16,10], index: 15, kind: output, shape index: {}]
  %s16 = sld [smem:[#allocation0]]
  $region98: #{tpu_custom_call.1} parent=0
    _
  %s18 = ssub.s32 1, %s16
  %s19 = scalar_select 0, %s18, %s16
  $region1: #{tpu_custom_call.1} parent=0
    #allocation2 [shape = 'u8[8192]{0}', space=vmem, size = 0x2000, scoped, tag = 'input window, operand 1, single buffered']
    #allocation3 [shape = 's32[1]{0}', space=sflag, size = 0x4, scoped, tag = 'scoped memory for tpu_custom_call.1']
    #allocation4 [shape = 's32[1]{0}', space=sflag, size = 0x4, scoped, tag = 'scoped memory for tpu_custom_call.1']
    #allocation5 [shape = 'u8[512]{0}', space=vmem, size = 0x400, scoped, tag = 'input window, operand 2, single buffered']
    #allocation6 [shape = 's32[1]{0}', space=sflag, size = 0x4, scoped, tag = 'scoped memory for tpu_custom_call.1']
    #allocation7 [shape = 'u8[512]{0}', space=vmem, size = 0x400, scoped, tag = 'input window, operand 4, single buffered']
    #allocation8 [shape = 'u8[65536]{0}', space=vmem, size = 0x10000, scoped, tag = 'input window, operand 5, single buffered']
    #allocation9 [shape = 's32[1]{0}', space=sflag, size = 0x4, scoped, tag = 'scoped memory for tpu_custom_call.1']
    #allocation10 [shape = 'u8[65536]{0}', space=vmem, size = 0x10000, scoped, tag = 'input window, operand 7, single buffered']
    #allocation11 [shape = 'u8[32768]{0}', space=vmem, size = 0x8000, scoped, tag = 'input window, operand 9, single buffered']
    #allocation12 [shape = 's32[1]{0}', space=sflag, size = 0x4, scoped, tag = 'scoped memory for tpu_custom_call.1']
    #allocation13 [shape = 'u8[32768]{0}', space=vmem, size = 0x8000, scoped, tag = 'input window, operand 11, single buffered']
    #allocation14 [shape = 'u8[8192]{0}', space=vmem, size = 0x2000, scoped, tag = 'output window, operand 0, single buffered']
    %20 = vsyncpa [#allocation3], 0
    %21 = vsyncpa [#allocation6], 0
    %22 = vsyncpa [#allocation9], 0
    %23 = vsyncpa [#allocation12], 0
    %24 = vsyncpa [#allocation4], 0
    // Predicated region
    $region2: #{tpu_custom_call.1} parent=1 // pred_check
      _
    $region3: #{tpu_custom_call.1} parent=1 // pred_check_branch
      %26 = sbr.rel (0) target = $region5
    $region4: #{tpu_custom_call.1} parent=1 // pred_region
      _
    $region5: #{tpu_custom_call.1} parent=1 // pred_fallthru
      _
    // Predicated region
    $region6: #{tpu_custom_call.1} parent=1 // pred_check
      _
    $region7: #{tpu_custom_call.1} parent=1 // pred_check_branch
      %28 = sbr.rel (0) target = $region9
    $region8: #{tpu_custom_call.1} parent=1 // pred_region
      %s30 = ssub.s32 256, 256
      %31 = vsyncadd [#allocation3], %s30
      %s32 = sshll.u32 [#allocation2], 4
      %s33 = int_to_ptr.vmem [resolvable:$true] %s32
      %38 = dma.hbm_to_vmem [thread:$0]  %s1, 256, %s33, [#allocation3], 64, 64, 4
    $region9: #{tpu_custom_call.1} parent=1 // pred_fallthru
      _
    // Predicated region
    $region10: #{tpu_custom_call.1} parent=1 // pred_check
      _
    $region11: #{tpu_custom_call.1} parent=1 // pred_check_branch
      %40 = sbr.rel (0) target = $region13
    $region12: #{tpu_custom_call.1} parent=1 // pred_region
      %s42 = ssub.s32 16, 16
      %43 = vsyncadd [#allocation6], %s42
      %s45 = sshll.u32 [#allocation5], 4
      %s46 = int_to_ptr.vmem [resolvable:$true] %s45
      %48 = dma.hbm_to_vmem [thread:$0]  %s2, 16, %s46, [#allocation6]
    $region13: #{tpu_custom_call.1} parent=1 // pred_fallthru
      _
    // Predicated region
    $region14: #{tpu_custom_call.1} parent=1 // pred_check
      _
    $region15: #{tpu_custom_call.1} parent=1 // pred_check_branch
      %50 = sbr.rel (0) target = $region17
    $region16: #{tpu_custom_call.1} parent=1 // pred_region
      _
    $region17: #{tpu_custom_call.1} parent=1 // pred_fallthru
      _
    // Predicated region
    $region18: #{tpu_custom_call.1} parent=1 // pred_check
      _
    $region19: #{tpu_custom_call.1} parent=1 // pred_check_branch
      %52 = sbr.rel (0) target = $region21
    $region20: #{tpu_custom_call.1} parent=1 // pred_region
      %s54 = ssub.s32 16, 16
      %55 = vsyncadd [#allocation6], %s54
      %s57 = sshll.u32 [#allocation7], 4
      %s58 = int_to_ptr.vmem [resolvable:$true] %s57
      %60 = dma.hbm_to_vmem [thread:$0]  %s4, 16, %s58, [#allocation6]
    $region21: #{tpu_custom_call.1} parent=1 // pred_fallthru
      _
    // Predicated region
    $region22: #{tpu_custom_call.1} parent=1 // pred_check
      _
    $region23: #{tpu_custom_call.1} parent=1 // pred_check_branch
      %62 = sbr.rel (0) target = $region25
    $region24: #{tpu_custom_call.1} parent=1 // pred_region
      %s64 = ssub.s32 2048, 2048
      %65 = vsyncadd [#allocation9], %s64
      %s66 = sshll.u32 [#allocation8], 4
      %s67 = int_to_ptr.vmem [resolvable:$true] %s66
      %72 = dma.hbm_to_vmem [thread:$0]  %s5, 2048, %s67, [#allocation9], 128, 128, 8
    $region25: #{tpu_custom_call.1} parent=1 // pred_fallthru
      _
    // Predicated region
    $region26: #{tpu_custom_call.1} parent=1 // pred_check
      _
    $region27: #{tpu_custom_call.1} parent=1 // pred_check_branch
      %74 = sbr.rel (0) target = $region29
    $region28: #{tpu_custom_call.1} parent=1 // pred_region
      _
    $region29: #{tpu_custom_call.1} parent=1 // pred_fallthru
      _
    // Predicated region
    $region30: #{tpu_custom_call.1} parent=1 // pred_check
      _
    $region31: #{tpu_custom_call.1} parent=1 // pred_check_branch
      %76 = sbr.rel (0) target = $region33
    $region32: #{tpu_custom_call.1} parent=1 // pred_region
      %s78 = ssub.s32 2048, 2048
      %79 = vsyncadd [#allocation9], %s78
      %s80 = sshll.u32 [#allocation10], 4
      %s81 = int_to_ptr.vmem [resolvable:$true] %s80
      %86 = dma.hbm_to_vmem [thread:$0]  %s7, 2048, %s81, [#allocation9], 64, 64, 4
    $region33: #{tpu_custom_call.1} parent=1 // pred_fallthru
      _
    // Predicated region
    $region34: #{tpu_custom_call.1} parent=1 // pred_check
      _
    $region35: #{tpu_custom_call.1} parent=1 // pred_check_branch
      %88 = sbr.rel (0) target = $region37
    $region36: #{tpu_custom_call.1} parent=1 // pred_region
      _
    $region37: #{tpu_custom_call.1} parent=1 // pred_fallthru
      _
    // Predicated region
    $region38: #{tpu_custom_call.1} parent=1 // pred_check
      _
    $region39: #{tpu_custom_call.1} parent=1 // pred_check_branch
      %90 = sbr.rel (0) target = $region41
    $region40: #{tpu_custom_call.1} parent=1 // pred_region
      %s92 = ssub.s32 1024, 1024
      %93 = vsyncadd [#allocation12], %s92
      %s94 = sshll.u32 [#allocation11], 4
      %s95 = int_to_ptr.vmem [resolvable:$true] %s94
      %100 = dma.hbm_to_vmem [thread:$0]  %s9, 1024, %s95, [#allocation12], 64, 64, 4
    $region41: #{tpu_custom_call.1} parent=1 // pred_fallthru
      _
    // Predicated region
    $region42: #{tpu_custom_call.1} parent=1 // pred_check
      _
    $region43: #{tpu_custom_call.1} parent=1 // pred_check_branch
      %102 = sbr.rel (0) target = $region45
    $region44: #{tpu_custom_call.1} parent=1 // pred_region
      _
    $region45: #{tpu_custom_call.1} parent=1 // pred_fallthru
      _
    // Predicated region
    $region46: #{tpu_custom_call.1} parent=1 // pred_check
      _
    $region47: #{tpu_custom_call.1} parent=1 // pred_check_branch
      %104 = sbr.rel (0) target = $region49
    $region48: #{tpu_custom_call.1} parent=1 // pred_region
      %s106 = ssub.s32 1024, 1024
      %107 = vsyncadd [#allocation12], %s106
      %s108 = sshll.u32 [#allocation13], 4
      %s109 = int_to_ptr.vmem [resolvable:$true] %s108
      %114 = dma.hbm_to_vmem [thread:$0]  %s11, 1024, %s109, [#allocation12], 64, 64, 4
    $region49: #{tpu_custom_call.1} parent=1 // pred_fallthru
      _
    // Predicated region
    $region50: #{tpu_custom_call.1} parent=1 // pred_check
      _
    $region51: #{tpu_custom_call.1} parent=1 // pred_check_branch
      %116 = sbr.rel (0) target = $region53
    $region52: #{tpu_custom_call.1} parent=1 // pred_region
      _
    $region53: #{tpu_custom_call.1} parent=1 // pred_fallthru
      _
    // Predicated region
    $region54: #{tpu_custom_call.1} parent=1 // pred_check
      _
    $region55: #{tpu_custom_call.1} parent=1 // pred_check_branch
      %118 = sbr.rel (0) target = $region57
    $region56: #{tpu_custom_call.1} parent=1 // pred_region
      _
    $region57: #{tpu_custom_call.1} parent=1 // pred_fallthru
      _
    // Predicated region
    $region58: #{tpu_custom_call.1} parent=1 // pred_check
      _
    $region59: #{tpu_custom_call.1} parent=1 // pred_check_branch
      %120 = sbr.rel (0) target = $region61
    $region60: #{tpu_custom_call.1} parent=1 // pred_region
      _
    $region61: #{tpu_custom_call.1} parent=1 // pred_fallthru
      _
    // Predicated region
    $region62: #{tpu_custom_call.1} parent=1 // pred_check
      _
    $region63: #{tpu_custom_call.1} parent=1 // pred_check_branch
      %122 = sbr.rel (0) target = $region65
    $region64: #{tpu_custom_call.1} parent=1 // pred_region
      %123 = dma.done [#allocation3], 256
    $region65: #{tpu_custom_call.1} parent=1 // pred_fallthru
      _
    // Predicated region
    $region66: #{tpu_custom_call.1} parent=1 // pred_check
      _
    $region67: #{tpu_custom_call.1} parent=1 // pred_check_branch
      %125 = sbr.rel (0) target = $region69
    $region68: #{tpu_custom_call.1} parent=1 // pred_region
      %126 = dma.done [#allocation6], 16
    $region69: #{tpu_custom_call.1} parent=1 // pred_fallthru
      _
    // Predicated region
    $region70: #{tpu_custom_call.1} parent=1 // pred_check
      _
    $region71: #{tpu_custom_call.1} parent=1 // pred_check_branch
      %128 = sbr.rel (0) target = $region73
    $region72: #{tpu_custom_call.1} parent=1 // pred_region
      %129 = dma.done [#allocation6], 16
    $region73: #{tpu_custom_call.1} parent=1 // pred_fallthru
      _
    // Predicated region
    $region74: #{tpu_custom_call.1} parent=1 // pred_check
      _
    $region75: #{tpu_custom_call.1} parent=1 // pred_check_branch
      %131 = sbr.rel (0) target = $region77
    $region76: #{tpu_custom_call.1} parent=1 // pred_region
      %132 = dma.done [#allocation9], 2048
    $region77: #{tpu_custom_call.1} parent=1 // pred_fallthru
      _
    // Predicated region
    $region78: #{tpu_custom_call.1} parent=1 // pred_check
      _
    $region79: #{tpu_custom_call.1} parent=1 // pred_check_branch
      %134 = sbr.rel (0) target = $region81
    $region80: #{tpu_custom_call.1} parent=1 // pred_region
      %135 = dma.done [#allocation9], 2048
    $region81: #{tpu_custom_call.1} parent=1 // pred_fallthru
      _
    // Predicated region
    $region82: #{tpu_custom_call.1} parent=1 // pred_check
      _
    $region83: #{tpu_custom_call.1} parent=1 // pred_check_branch
      %137 = sbr.rel (0) target = $region85
    $region84: #{tpu_custom_call.1} parent=1 // pred_region
      %138 = dma.done [#allocation12], 1024
    $region85: #{tpu_custom_call.1} parent=1 // pred_fallthru
      _
    // Predicated region
    $region86: #{tpu_custom_call.1} parent=1 // pred_check
      _
    $region87: #{tpu_custom_call.1} parent=1 // pred_check_branch
      %140 = sbr.rel (0) target = $region89
    $region88: #{tpu_custom_call.1} parent=1 // pred_region
      %141 = dma.done [#allocation12], 1024
    $region89: #{tpu_custom_call.1} parent=1 // pred_fallthru
      _
    %v144 = vld [vmem:[%s0] sm:$0xff]
    %v145 = vld [vmem:[%s0 + $0x8] sm:$0xff]
    %v146 = vld [vmem:[#allocation2] sm:$0xf]
    %v147 = vld [vmem:[#allocation2 + $0x4] sm:$0xf]
    %v148 = vld [vmem:[#allocation2 + $0x8] sm:$0xf]
    %v149 = vld [vmem:[#allocation2 + $0xc] sm:$0xf]
    %v150 = vld [vmem:[#allocation5] sm:$0x1]
    %v151 = vpack.c.bf16 %v145, %v144
    %v153 = vlaneseq
    %v154 = vshrl.u32 %v153, 7
    %v155 = vsub.s32 0, %v154
    %v156 = vrot.slane %v150, %v155
    %v162 = vunpack.c.l.b16 %v146
    %v163 = vunpack.c.l.b16 %v147
    %v164 = vunpack.c.l.b16 %v148
    %v165 = vunpack.c.l.b16 %v149
    %v166 = vpack.c.b16 %v163, %v162
    %v167 = vpack.c.b16 %v165, %v164
    %vm170 = vcmask 261120
    %v172 = vsel %vm170, %v151, 0
    %174 = vmatprep.subr.bf16.mxu0 0
    %175 = vmatpush1.bf16.msra.mxu0 %v166
    %176 = vmatprep.subr.bf16.mxu0 0
    %177 = vmatpush1.bf16.msra.mxu0 %v167
    %178 = vmatprep.subr.bf16.mxu0 0
    %179 = vmatpush1.bf16.msra.mxu0 0
    %180 = vmatprep.subr.bf16.mxu0 0
    %181 = vmatpush1.bf16.msra.mxu0 0
    %182 = vmatprep.subr.bf16.mxu0 0
    %183 = vmatpush1.bf16.msra.mxu0 0
    %184 = vmatprep.subr.bf16.mxu0 0
    %185 = vmatpush1.bf16.msra.mxu0 0
    %186 = vmatprep.subr.bf16.mxu0 0
    %187 = vmatpush1.bf16.msra.mxu0 0
    %188 = vmatprep.subr.bf16.mxu0 0
    %189 = vmatpush1.bf16.msra.mxu0 0
    %190 = vmatprep.subr.bf16.mxu0 0
    %191 = vmatpush1.bf16.msra.mxu0 0
    %192 = vmatprep.subr.bf16.mxu0 0
    %193 = vmatpush1.bf16.msra.mxu0 0
    %194 = vmatprep.subr.bf16.mxu0 0
    %195 = vmatpush1.bf16.msra.mxu0 0
    %196 = vmatprep.subr.bf16.mxu0 0
    %197 = vmatpush1.bf16.msra.mxu0 0
    %198 = vmatprep.subr.bf16.mxu0 0
    %199 = vmatpush1.bf16.msra.mxu0 0
    %200 = vmatprep.subr.bf16.mxu0 0
    %201 = vmatpush1.bf16.msra.mxu0 0
    %202 = vmatprep.subr.bf16.mxu0 0
    %203 = vmatpush1.bf16.msra.mxu0 0
    %204 = vmatprep.subr.bf16.mxu0 0
    %205 = vmatpush1.bf16.msra.mxu0 0
    %206 = vmatprep.mubr.bf16.mxu0 0
    %207 = vmatmul.mubr.bf16.gmra.mrb[0].mxu0 %v172
    %v208 = vpop.f32.mrb[0].mxu0
    %v209 = vadd.f32 %v156, %v208
    %v210 = vpop.f32.mrb[0].mxu0
    %v211 = vpop.f32.mrb[0].mxu0
    %v212 = vadd.f32 %v156, %v211
    %v213 = vpop.f32.mrb[0].mxu0
    %214 = vdwg.mxu0
    %v215 = vpack.c.bf16 %v212, %v209
    %v216 = vmul.bf16 %v215, 1036860877
    %v217 = vmax.bf16 %v215, %v216
    %v218 = vld [vmem:[%s3] sm:$0xf]
    %v219 = vld [vmem:[%s3 + $0x4] sm:$0xf]
    %v220 = vld [vmem:[%s3 + $0x8] sm:$0xf]
    %v221 = vld [vmem:[%s3 + $0xc] sm:$0xf]
    %v222 = vld [vmem:[%s3 + $0x10] sm:$0xf]
    %v223 = vld [vmem:[%s3 + $0x14] sm:$0xf]
    %v224 = vld [vmem:[%s3 + $0x18] sm:$0xf]
    %v225 = vld [vmem:[%s3 + $0x1c] sm:$0xf]
    %v226 = vld [vmem:[%s3 + $0x20] sm:$0xf]
    %v227 = vld [vmem:[%s3 + $0x24] sm:$0xf]
    %v228 = vld [vmem:[%s3 + $0x28] sm:$0xf]
    %v229 = vld [vmem:[%s3 + $0x2c] sm:$0xf]
    %v230 = vld [vmem:[%s3 + $0x30] sm:$0xf]
    %v231 = vld [vmem:[%s3 + $0x34] sm:$0xf]
    %v232 = vld [vmem:[%s3 + $0x38] sm:$0xf]
    %v233 = vld [vmem:[%s3 + $0x3c] sm:$0xf]
    %v234 = vld [vmem:[#allocation7] sm:$0x1]
    %v236 = vlaneseq
    %v237 = vshrl.u32 %v236, 7
    %v238 = vsub.s32 0, %v237
    %v239 = vrot.slane %v234, %v238
    %v257 = vunpack.c.l.b16 %v218
    %v258 = vunpack.c.l.b16 %v219
    %v259 = vunpack.c.l.b16 %v220
    %v260 = vunpack.c.l.b16 %v221
    %v261 = vunpack.c.l.b16 %v222
    %v262 = vunpack.c.l.b16 %v223
    %v263 = vunpack.c.l.b16 %v224
    %v264 = vunpack.c.l.b16 %v225
    %v265 = vunpack.c.l.b16 %v226
    %v266 = vunpack.c.l.b16 %v227
    %v267 = vunpack.c.l.b16 %v228
    %v268 = vunpack.c.l.b16 %v229
    %v269 = vunpack.c.l.b16 %v230
    %v270 = vunpack.c.l.b16 %v231
    %v271 = vunpack.c.l.b16 %v232
    %v272 = vunpack.c.l.b16 %v233
    %v273 = vpack.c.b16 %v258, %v257
    %v274 = vpack.c.b16 %v260, %v259
    %v275 = vpack.c.b16 %v262, %v261
    %v276 = vpack.c.b16 %v264, %v263
    %v277 = vpack.c.b16 %v266, %v265
    %v278 = vpack.c.b16 %v268, %v267
    %v279 = vpack.c.b16 %v270, %v269
    %v280 = vpack.c.b16 %v272, %v271
    %289 = vmatprep.subr.bf16.mxu0 0
    %290 = vmatpush1.bf16.msra.mxu0 %v273
    %291 = vmatprep.subr.bf16.mxu0 0
    %292 = vmatpush1.bf16.msra.mxu0 %v274
    %293 = vmatprep.subr.bf16.mxu0 0
    %294 = vmatpush1.bf16.msra.mxu0 %v275
    %295 = vmatprep.subr.bf16.mxu0 0
    %296 = vmatpush1.bf16.msra.mxu0 %v276
    %297 = vmatprep.subr.bf16.mxu0 0
    %298 = vmatpush1.bf16.msra.mxu0 %v277
    %299 = vmatprep.subr.bf16.mxu0 0
    %300 = vmatpush1.bf16.msra.mxu0 %v278
    %301 = vmatprep.subr.bf16.mxu0 0
    %302 = vmatpush1.bf16.msra.mxu0 %v279
    %303 = vmatprep.subr.bf16.mxu0 0
    %304 = vmatpush1.bf16.msra.mxu0 %v280
    %305 = vmatprep.subr.bf16.mxu0 0
    %306 = vmatpush1.bf16.msra.mxu0 0
    %307 = vmatprep.subr.bf16.mxu0 0
    %308 = vmatpush1.bf16.msra.mxu0 0
    %309 = vmatprep.subr.bf16.mxu0 0
    %310 = vmatpush1.bf16.msra.mxu0 0
    %311 = vmatprep.subr.bf16.mxu0 0
    %312 = vmatpush1.bf16.msra.mxu0 0
    %313 = vmatprep.subr.bf16.mxu0 0
    %314 = vmatpush1.bf16.msra.mxu0 0
    %315 = vmatprep.subr.bf16.mxu0 0
    %316 = vmatpush1.bf16.msra.mxu0 0
    %317 = vmatprep.subr.bf16.mxu0 0
    %318 = vmatpush1.bf16.msra.mxu0 0
    %319 = vmatprep.subr.bf16.mxu0 0
    %320 = vmatpush1.bf16.msra.mxu0 0
    %321 = vmatprep.mubr.bf16.mxu0 0
    %322 = vmatmul.mubr.bf16.gmra.mrb[0].mxu0 %v217
    %v323 = vpop.f32.mrb[0].mxu0
    %v324 = vadd.f32 %v239, %v323
    %v325 = vpop.f32.mrb[0].mxu0
    %v326 = vpop.f32.mrb[0].mxu0
    %v327 = vadd.f32 %v239, %v326
    %v328 = vpop.f32.mrb[0].mxu0
    %329 = vdwg.mxu0
    %v330 = vpack.c.bf16 %v327, %v324
    %v331 = vmul.bf16 %v330, 1036860877
    %v332 = vmax.bf16 %v330, %v331
    %v333 = vld [vmem:[#allocation8] sm:$0xff]
    %v334 = vld [vmem:[#allocation8 + $0x8] sm:$0xff]
    %v335 = vld [vmem:[#allocation8 + $0x10] sm:$0xff]
    %v336 = vld [vmem:[#allocation8 + $0x18] sm:$0xff]
    %v337 = vld [vmem:[#allocation8 + $0x20] sm:$0xff]
    %v338 = vld [vmem:[#allocation8 + $0x28] sm:$0xff]
    %v339 = vld [vmem:[#allocation8 + $0x30] sm:$0xff]
    %v340 = vld [vmem:[#allocation8 + $0x38] sm:$0xff]
    %v341 = vld [vmem:[#allocation8 + $0x40] sm:$0xff]
    %v342 = vld [vmem:[#allocation8 + $0x48] sm:$0xff]
    %v343 = vld [vmem:[#allocation8 + $0x50] sm:$0xff]
    %v344 = vld [vmem:[#allocation8 + $0x58] sm:$0xff]
    %v345 = vld [vmem:[#allocation8 + $0x60] sm:$0xff]
    %v346 = vld [vmem:[#allocation8 + $0x68] sm:$0xff]
    %v347 = vld [vmem:[#allocation8 + $0x70] sm:$0xff]
    %v348 = vld [vmem:[#allocation8 + $0x78] sm:$0xff]
    %v349 = vld [vmem:[%s6] sm:$0x3]
    %v351 = vlaneseq
    %v352 = vshrl.u32 %v351, 7
    %v353 = vsub.s32 0, %v352
    %v354 = vrot.slane %v349, %v353
    %v355 = vlaneseq
    %v356 = vshrl.u32 %v355, 7
    %v357 = vsub.s32 1, %v356
    %v358 = vrot.slane %v349, %v357
    %v377 = vunpack.c.l.b16 %v333
    %v378 = vunpack.c.h.b16 %v333
    %v379 = vunpack.c.l.b16 %v334
    %v380 = vunpack.c.h.b16 %v334
    %v381 = vunpack.c.l.b16 %v335
    %v382 = vunpack.c.h.b16 %v335
    %v383 = vunpack.c.l.b16 %v336
    %v384 = vunpack.c.h.b16 %v336
    %v385 = vunpack.c.l.b16 %v337
    %v386 = vunpack.c.h.b16 %v337
    %v387 = vunpack.c.l.b16 %v338
    %v388 = vunpack.c.h.b16 %v338
    %v389 = vunpack.c.l.b16 %v339
    %v390 = vunpack.c.h.b16 %v339
    %v391 = vunpack.c.l.b16 %v340
    %v392 = vunpack.c.h.b16 %v340
    %v393 = vunpack.c.l.b16 %v341
    %v394 = vunpack.c.h.b16 %v341
    %v395 = vunpack.c.l.b16 %v342
    %v396 = vunpack.c.h.b16 %v342
    %v397 = vunpack.c.l.b16 %v343
    %v398 = vunpack.c.h.b16 %v343
    %v399 = vunpack.c.l.b16 %v344
    %v400 = vunpack.c.h.b16 %v344
    %v401 = vunpack.c.l.b16 %v345
    %v402 = vunpack.c.h.b16 %v345
    %v403 = vunpack.c.l.b16 %v346
    %v404 = vunpack.c.h.b16 %v346
    %v405 = vunpack.c.l.b16 %v347
    %v406 = vunpack.c.h.b16 %v347
    %v407 = vunpack.c.l.b16 %v348
    %v408 = vunpack.c.h.b16 %v348
    %v409 = vpack.c.b16 %v379, %v377
    %v410 = vpack.c.b16 %v380, %v378
    %v411 = vpack.c.b16 %v383, %v381
    %v412 = vpack.c.b16 %v384, %v382
    %v413 = vpack.c.b16 %v387, %v385
    %v414 = vpack.c.b16 %v388, %v386
    %v415 = vpack.c.b16 %v391, %v389
    %v416 = vpack.c.b16 %v392, %v390
    %v417 = vpack.c.b16 %v395, %v393
    %v418 = vpack.c.b16 %v396, %v394
    %v419 = vpack.c.b16 %v399, %v397
    %v420 = vpack.c.b16 %v400, %v398
    %v421 = vpack.c.b16 %v403, %v401
    %v422 = vpack.c.b16 %v404, %v402
    %v423 = vpack.c.b16 %v407, %v405
    %v424 = vpack.c.b16 %v408, %v406
    %441 = vmatprep.subr.bf16.mxu0 %v410
    %442 = vmatpush1.bf16.msra.mxu0 %v409
    %443 = vmatprep.subr.bf16.mxu0 %v412
    %444 = vmatpush1.bf16.msra.mxu0 %v411
    %445 = vmatprep.subr.bf16.mxu0 %v414
    %446 = vmatpush1.bf16.msra.mxu0 %v413
    %447 = vmatprep.subr.bf16.mxu0 %v416
    %448 = vmatpush1.bf16.msra.mxu0 %v415
    %449 = vmatprep.subr.bf16.mxu0 %v418
    %450 = vmatpush1.bf16.msra.mxu0 %v417
    %451 = vmatprep.subr.bf16.mxu0 %v420
    %452 = vmatpush1.bf16.msra.mxu0 %v419
    %453 = vmatprep.subr.bf16.mxu0 %v422
    %454 = vmatpush1.bf16.msra.mxu0 %v421
    %455 = vmatprep.subr.bf16.mxu0 %v424
    %456 = vmatpush1.bf16.msra.mxu0 %v423
    %457 = vmatprep.subr.bf16.mxu0 0
    %458 = vmatpush1.bf16.msra.mxu0 0
    %459 = vmatprep.subr.bf16.mxu0 0
    %460 = vmatpush1.bf16.msra.mxu0 0
    %461 = vmatprep.subr.bf16.mxu0 0
    %462 = vmatpush1.bf16.msra.mxu0 0
    %463 = vmatprep.subr.bf16.mxu0 0
    %464 = vmatpush1.bf16.msra.mxu0 0
    %465 = vmatprep.subr.bf16.mxu0 0
    %466 = vmatpush1.bf16.msra.mxu0 0
    %467 = vmatprep.subr.bf16.mxu0 0
    %468 = vmatpush1.bf16.msra.mxu0 0
    %469 = vmatprep.subr.bf16.mxu0 0
    %470 = vmatpush1.bf16.msra.mxu0 0
    %471 = vmatprep.subr.bf16.mxu0 0
    %472 = vmatpush1.bf16.msra.mxu0 0
    %473 = vmatprep.mubr.bf16.mxu0 0
    %474 = vmatmul.mubr.bf16.gmra.mrb[0].mxu0 %v332
    %v475 = vpop.f32.mrb[0].mxu0
    %v476 = vadd.f32 %v354, %v475
    %v477 = vpop.f32.mrb[0].mxu0
    %v478 = vadd.f32 %v358, %v477
    %v479 = vpop.f32.mrb[0].mxu0
    %v480 = vadd.f32 %v354, %v479
    %v481 = vpop.f32.mrb[0].mxu0
    %v482 = vadd.f32 %v358, %v481
    %483 = vdwg.mxu0
    %v484 = vpack.c.bf16 %v480, %v476
    %v485 = vpack.c.bf16 %v482, %v478
    %v486 = vmul.bf16 %v484, 1036860877
    %v487 = vmul.bf16 %v485, 1036860877
    %v488 = vmax.bf16 %v484, %v486
    %v489 = vmax.bf16 %v485, %v487
    %v490 = vld [vmem:[#allocation10] sm:$0xf]
    %v491 = vld [vmem:[#allocation10 + $0x4] sm:$0xf]
    %v492 = vld [vmem:[#allocation10 + $0x8] sm:$0xf]
    %v493 = vld [vmem:[#allocation10 + $0xc] sm:$0xf]
    %v494 = vld [vmem:[#allocation10 + $0x10] sm:$0xf]
    %v495 = vld [vmem:[#allocation10 + $0x14] sm:$0xf]
    %v496 = vld [vmem:[#allocation10 + $0x18] sm:$0xf]
    %v497 = vld [vmem:[#allocation10 + $0x1c] sm:$0xf]
    %v498 = vld [vmem:[#allocation10 + $0x20] sm:$0xf]
    %v499 = vld [vmem:[#allocation10 + $0x24] sm:$0xf]
    %v500 = vld [vmem:[#allocation10 + $0x28] sm:$0xf]
    %v501 = vld [vmem:[#allocation10 + $0x2c] sm:$0xf]
    %v502 = vld [vmem:[#allocation10 + $0x30] sm:$0xf]
    %v503 = vld [vmem:[#allocation10 + $0x34] sm:$0xf]
    %v504 = vld [vmem:[#allocation10 + $0x38] sm:$0xf]
    %v505 = vld [vmem:[#allocation10 + $0x3c] sm:$0xf]
    %v506 = vld [vmem:[#allocation10 + $0x40] sm:$0xf]
    %v507 = vld [vmem:[#allocation10 + $0x44] sm:$0xf]
    %v508 = vld [vmem:[#allocation10 + $0x48] sm:$0xf]
    %v509 = vld [vmem:[#allocation10 + $0x4c] sm:$0xf]
    %v510 = vld [vmem:[#allocation10 + $0x50] sm:$0xf]
    %v511 = vld [vmem:[#allocation10 + $0x54] sm:$0xf]
    %v512 = vld [vmem:[#allocation10 + $0x58] sm:$0xf]
    %v513 = vld [vmem:[#allocation10 + $0x5c] sm:$0xf]
    %v514 = vld [vmem:[#allocation10 + $0x60] sm:$0xf]
    %v515 = vld [vmem:[#allocation10 + $0x64] sm:$0xf]
    %v516 = vld [vmem:[#allocation10 + $0x68] sm:$0xf]
    %v517 = vld [vmem:[#allocation10 + $0x6c] sm:$0xf]
    %v518 = vld [vmem:[#allocation10 + $0x70] sm:$0xf]
    %v519 = vld [vmem:[#allocation10 + $0x74] sm:$0xf]
    %v520 = vld [vmem:[#allocation10 + $0x78] sm:$0xf]
    %v521 = vld [vmem:[#allocation10 + $0x7c] sm:$0xf]
    %v522 = vld [vmem:[%s8] sm:$0x1]
    %v524 = vlaneseq
    %v525 = vshrl.u32 %v524, 7
    %v526 = vsub.s32 0, %v525
    %v527 = vrot.slane %v522, %v526
    %v561 = vunpack.c.l.b16 %v490
    %v562 = vunpack.c.l.b16 %v491
    %v563 = vunpack.c.l.b16 %v492
    %v564 = vunpack.c.l.b16 %v493
    %v565 = vunpack.c.l.b16 %v494
    %v566 = vunpack.c.l.b16 %v495
    %v567 = vunpack.c.l.b16 %v496
    %v568 = vunpack.c.l.b16 %v497
    %v569 = vunpack.c.l.b16 %v498
    %v570 = vunpack.c.l.b16 %v499
    %v571 = vunpack.c.l.b16 %v500
    %v572 = vunpack.c.l.b16 %v501
    %v573 = vunpack.c.l.b16 %v502
    %v574 = vunpack.c.l.b16 %v503
    %v575 = vunpack.c.l.b16 %v504
    %v576 = vunpack.c.l.b16 %v505
    %v577 = vunpack.c.l.b16 %v506
    %v578 = vunpack.c.l.b16 %v507
    %v579 = vunpack.c.l.b16 %v508
    %v580 = vunpack.c.l.b16 %v509
    %v581 = vunpack.c.l.b16 %v510
    %v582 = vunpack.c.l.b16 %v511
    %v583 = vunpack.c.l.b16 %v512
    %v584 = vunpack.c.l.b16 %v513
    %v585 = vunpack.c.l.b16 %v514
    %v586 = vunpack.c.l.b16 %v515
    %v587 = vunpack.c.l.b16 %v516
    %v588 = vunpack.c.l.b16 %v517
    %v589 = vunpack.c.l.b16 %v518
    %v590 = vunpack.c.l.b16 %v519
    %v591 = vunpack.c.l.b16 %v520
    %v592 = vunpack.c.l.b16 %v521
    %v593 = vpack.c.b16 %v562, %v561
    %v594 = vpack.c.b16 %v564, %v563
    %v595 = vpack.c.b16 %v566, %v565
    %v596 = vpack.c.b16 %v568, %v567
    %v597 = vpack.c.b16 %v570, %v569
    %v598 = vpack.c.b16 %v572, %v571
    %v599 = vpack.c.b16 %v574, %v573
    %v600 = vpack.c.b16 %v576, %v575
    %v601 = vpack.c.b16 %v578, %v577
    %v602 = vpack.c.b16 %v580, %v579
    %v603 = vpack.c.b16 %v582, %v581
    %v604 = vpack.c.b16 %v584, %v583
    %v605 = vpack.c.b16 %v586, %v585
    %v606 = vpack.c.b16 %v588, %v587
    %v607 = vpack.c.b16 %v590, %v589
    %v608 = vpack.c.b16 %v592, %v591
    %625 = vmatprep.subr.bf16.mxu0 0
    %626 = vmatpush1.bf16.msra.mxu0 %v593
    %627 = vmatprep.subr.bf16.mxu0 0
    %628 = vmatpush1.bf16.msra.mxu0 %v594
    %629 = vmatprep.subr.bf16.mxu0 0
    %630 = vmatpush1.bf16.msra.mxu0 %v595
    %631 = vmatprep.subr.bf16.mxu0 0
    %632 = vmatpush1.bf16.msra.mxu0 %v596
    %633 = vmatprep.subr.bf16.mxu0 0
    %634 = vmatpush1.bf16.msra.mxu0 %v597
    %635 = vmatprep.subr.bf16.mxu0 0
    %636 = vmatpush1.bf16.msra.mxu0 %v598
    %637 = vmatprep.subr.bf16.mxu0 0
    %638 = vmatpush1.bf16.msra.mxu0 %v599
    %639 = vmatprep.subr.bf16.mxu0 0
    %640 = vmatpush1.bf16.msra.mxu0 %v600
    %641 = vmatprep.subr.bf16.mxu0 0
    %642 = vmatpush1.bf16.msra.mxu0 %v601
    %643 = vmatprep.subr.bf16.mxu0 0
    %644 = vmatpush1.bf16.msra.mxu0 %v602
    %645 = vmatprep.subr.bf16.mxu0 0
    %646 = vmatpush1.bf16.msra.mxu0 %v603
    %647 = vmatprep.subr.bf16.mxu0 0
    %648 = vmatpush1.bf16.msra.mxu0 %v604
    %649 = vmatprep.subr.bf16.mxu0 0
    %650 = vmatpush1.bf16.msra.mxu0 %v605
    %651 = vmatprep.subr.bf16.mxu0 0
    %652 = vmatpush1.bf16.msra.mxu0 %v606
    %653 = vmatprep.subr.bf16.mxu0 0
    %654 = vmatpush1.bf16.msra.mxu0 %v607
    %655 = vmatprep.subr.bf16.mxu0 0
    %656 = vmatpush1.bf16.msra.mxu0 %v608
    %657 = vmatprep.mubr.bf16.mxu0 %v489
    %658 = vmatmul.mubr.bf16.gmra.mrb[0].mxu0 %v488
    %v659 = vpop.f32.mrb[0].mxu0
    %v660 = vadd.f32 %v527, %v659
    %v661 = vpop.f32.mrb[0].mxu0
    %v662 = vpop.f32.mrb[0].mxu0
    %v663 = vadd.f32 %v527, %v662
    %v664 = vpop.f32.mrb[0].mxu0
    %665 = vdwg.mxu0
    %v666 = vpack.c.bf16 %v663, %v660
    %v667 = vmul.bf16 %v666, 1036860877
    %v668 = vmax.bf16 %v666, %v667
    %v669 = vld [vmem:[#allocation11] sm:$0xf]
    %v670 = vld [vmem:[#allocation11 + $0x4] sm:$0xf]
    %v671 = vld [vmem:[#allocation11 + $0x8] sm:$0xf]
    %v672 = vld [vmem:[#allocation11 + $0xc] sm:$0xf]
    %v673 = vld [vmem:[#allocation11 + $0x10] sm:$0xf]
    %v674 = vld [vmem:[#allocation11 + $0x14] sm:$0xf]
    %v675 = vld [vmem:[#allocation11 + $0x18] sm:$0xf]
    %v676 = vld [vmem:[#allocation11 + $0x1c] sm:$0xf]
    %v677 = vld [vmem:[#allocation11 + $0x20] sm:$0xf]
    %v678 = vld [vmem:[#allocation11 + $0x24] sm:$0xf]
    %v679 = vld [vmem:[#allocation11 + $0x28] sm:$0xf]
    %v680 = vld [vmem:[#allocation11 + $0x2c] sm:$0xf]
    %v681 = vld [vmem:[#allocation11 + $0x30] sm:$0xf]
    %v682 = vld [vmem:[#allocation11 + $0x34] sm:$0xf]
    %v683 = vld [vmem:[#allocation11 + $0x38] sm:$0xf]
    %v684 = vld [vmem:[#allocation11 + $0x3c] sm:$0xf]
    %v685 = vld [vmem:[%s10] sm:$0x1]
    %v687 = vlaneseq
    %v688 = vshrl.u32 %v687, 7
    %v689 = vsub.s32 0, %v688
    %v690 = vrot.slane %v685, %v689
    %v708 = vunpack.c.l.b16 %v669
    %v709 = vunpack.c.l.b16 %v670
    %v710 = vunpack.c.l.b16 %v671
    %v711 = vunpack.c.l.b16 %v672
    %v712 = vunpack.c.l.b16 %v673
    %v713 = vunpack.c.l.b16 %v674
    %v714 = vunpack.c.l.b16 %v675
    %v715 = vunpack.c.l.b16 %v676
    %v716 = vunpack.c.l.b16 %v677
    %v717 = vunpack.c.l.b16 %v678
    %v718 = vunpack.c.l.b16 %v679
    %v719 = vunpack.c.l.b16 %v680
    %v720 = vunpack.c.l.b16 %v681
    %v721 = vunpack.c.l.b16 %v682
    %v722 = vunpack.c.l.b16 %v683
    %v723 = vunpack.c.l.b16 %v684
    %v724 = vpack.c.b16 %v709, %v708
    %v725 = vpack.c.b16 %v711, %v710
    %v726 = vpack.c.b16 %v713, %v712
    %v727 = vpack.c.b16 %v715, %v714
    %v728 = vpack.c.b16 %v717, %v716
    %v729 = vpack.c.b16 %v719, %v718
    %v730 = vpack.c.b16 %v721, %v720
    %v731 = vpack.c.b16 %v723, %v722
    %740 = vmatprep.subr.bf16.mxu0 0
    %741 = vmatpush1.bf16.msra.mxu0 %v724
    %742 = vmatprep.subr.bf16.mxu0 0
    %743 = vmatpush1.bf16.msra.mxu0 %v725
    %744 = vmatprep.subr.bf16.mxu0 0
    %745 = vmatpush1.bf16.msra.mxu0 %v726
    %746 = vmatprep.subr.bf16.mxu0 0
    %747 = vmatpush1.bf16.msra.mxu0 %v727
    %748 = vmatprep.subr.bf16.mxu0 0
    %749 = vmatpush1.bf16.msra.mxu0 %v728
    %750 = vmatprep.subr.bf16.mxu0 0
    %751 = vmatpush1.bf16.msra.mxu0 %v729
    %752 = vmatprep.subr.bf16.mxu0 0
    %753 = vmatpush1.bf16.msra.mxu0 %v730
    %754 = vmatprep.subr.bf16.mxu0 0
    %755 = vmatpush1.bf16.msra.mxu0 %v731
    %756 = vmatprep.subr.bf16.mxu0 0
    %757 = vmatpush1.bf16.msra.mxu0 0
    %758 = vmatprep.subr.bf16.mxu0 0
    %759 = vmatpush1.bf16.msra.mxu0 0
    %760 = vmatprep.subr.bf16.mxu0 0
    %761 = vmatpush1.bf16.msra.mxu0 0
    %762 = vmatprep.subr.bf16.mxu0 0
    %763 = vmatpush1.bf16.msra.mxu0 0
    %764 = vmatprep.subr.bf16.mxu0 0
    %765 = vmatpush1.bf16.msra.mxu0 0
    %766 = vmatprep.subr.bf16.mxu0 0
    %767 = vmatpush1.bf16.msra.mxu0 0
    %768 = vmatprep.subr.bf16.mxu0 0
    %769 = vmatpush1.bf16.msra.mxu0 0
    %770 = vmatprep.subr.bf16.mxu0 0
    %771 = vmatpush1.bf16.msra.mxu0 0
    %772 = vmatprep.mubr.bf16.mxu0 0
    %773 = vmatmul.mubr.bf16.gmra.mrb[0].mxu0 %v668
    %v774 = vpop.f32.mrb[0].mxu0
    %v775 = vadd.f32 %v690, %v774
    %v776 = vpop.f32.mrb[0].mxu0
    %v777 = vpop.f32.mrb[0].mxu0
    %v778 = vadd.f32 %v690, %v777
    %v779 = vpop.f32.mrb[0].mxu0
    %780 = vdwg.mxu0
    %v781 = vpack.c.bf16 %v778, %v775
    %v782 = vmul.bf16 %v781, 1036860877
    %v783 = vmax.bf16 %v781, %v782
    %v784 = vld [vmem:[#allocation13] sm:$0xf]
    %v785 = vld [vmem:[#allocation13 + $0x4] sm:$0xf]
    %v786 = vld [vmem:[#allocation13 + $0x8] sm:$0xf]
    %v787 = vld [vmem:[#allocation13 + $0xc] sm:$0xf]
    %v788 = vld [vmem:[#allocation13 + $0x10] sm:$0xf]
    %v789 = vld [vmem:[#allocation13 + $0x14] sm:$0xf]
    %v790 = vld [vmem:[#allocation13 + $0x18] sm:$0xf]
    %v791 = vld [vmem:[#allocation13 + $0x1c] sm:$0xf]
    %v792 = vld [vmem:[#allocation13 + $0x20] sm:$0xf]
    %v793 = vld [vmem:[#allocation13 + $0x24] sm:$0xf]
    %v794 = vld [vmem:[#allocation13 + $0x28] sm:$0xf]
    %v795 = vld [vmem:[#allocation13 + $0x2c] sm:$0xf]
    %v796 = vld [vmem:[#allocation13 + $0x30] sm:$0xf]
    %v797 = vld [vmem:[#allocation13 + $0x34] sm:$0xf]
    %v798 = vld [vmem:[#allocation13 + $0x38] sm:$0xf]
    %v799 = vld [vmem:[#allocation13 + $0x3c] sm:$0xf]
    %v800 = vld [vmem:[%s12] sm:$0x1]
    %v802 = vlaneseq
    %v803 = vshrl.u32 %v802, 7
    %v804 = vsub.s32 0, %v803
    %v805 = vrot.slane %v800, %v804
    %v823 = vunpack.c.l.b16 %v784
    %v824 = vunpack.c.l.b16 %v785
    %v825 = vunpack.c.l.b16 %v786
    %v826 = vunpack.c.l.b16 %v787
    %v827 = vunpack.c.l.b16 %v788
    %v828 = vunpack.c.l.b16 %v789
    %v829 = vunpack.c.l.b16 %v790
    %v830 = vunpack.c.l.b16 %v791
    %v831 = vunpack.c.l.b16 %v792
    %v832 = vunpack.c.l.b16 %v793
    %v833 = vunpack.c.l.b16 %v794
    %v834 = vunpack.c.l.b16 %v795
    %v835 = vunpack.c.l.b16 %v796
    %v836 = vunpack.c.l.b16 %v797
    %v837 = vunpack.c.l.b16 %v798
    %v838 = vunpack.c.l.b16 %v799
    %v839 = vpack.c.b16 %v824, %v823
    %v840 = vpack.c.b16 %v826, %v825
    %v841 = vpack.c.b16 %v828, %v827
    %v842 = vpack.c.b16 %v830, %v829
    %v843 = vpack.c.b16 %v832, %v831
    %v844 = vpack.c.b16 %v834, %v833
    %v845 = vpack.c.b16 %v836, %v835
    %v846 = vpack.c.b16 %v838, %v837
    %855 = vmatprep.subr.bf16.mxu0 0
    %856 = vmatpush1.bf16.msra.mxu0 %v839
    %857 = vmatprep.subr.bf16.mxu0 0
    %858 = vmatpush1.bf16.msra.mxu0 %v840
    %859 = vmatprep.subr.bf16.mxu0 0
    %860 = vmatpush1.bf16.msra.mxu0 %v841
    %861 = vmatprep.subr.bf16.mxu0 0
    %862 = vmatpush1.bf16.msra.mxu0 %v842
    %863 = vmatprep.subr.bf16.mxu0 0
    %864 = vmatpush1.bf16.msra.mxu0 %v843
    %865 = vmatprep.subr.bf16.mxu0 0
    %866 = vmatpush1.bf16.msra.mxu0 %v844
    %867 = vmatprep.subr.bf16.mxu0 0
    %868 = vmatpush1.bf16.msra.mxu0 %v845
    %869 = vmatprep.subr.bf16.mxu0 0
    %870 = vmatpush1.bf16.msra.mxu0 %v846
    %871 = vmatprep.subr.bf16.mxu0 0
    %872 = vmatpush1.bf16.msra.mxu0 0
    %873 = vmatprep.subr.bf16.mxu0 0
    %874 = vmatpush1.bf16.msra.mxu0 0
    %875 = vmatprep.subr.bf16.mxu0 0
    %876 = vmatpush1.bf16.msra.mxu0 0
    %877 = vmatprep.subr.bf16.mxu0 0
    %878 = vmatpush1.bf16.msra.mxu0 0
    %879 = vmatprep.subr.bf16.mxu0 0
    %880 = vmatpush1.bf16.msra.mxu0 0
    %881 = vmatprep.subr.bf16.mxu0 0
    %882 = vmatpush1.bf16.msra.mxu0 0
    %883 = vmatprep.subr.bf16.mxu0 0
    %884 = vmatpush1.bf16.msra.mxu0 0
    %885 = vmatprep.subr.bf16.mxu0 0
    %886 = vmatpush1.bf16.msra.mxu0 0
    %887 = vmatprep.mubr.bf16.mxu0 0
    %888 = vmatmul.mubr.bf16.gmra.mrb[0].mxu0 %v783
    %v889 = vpop.f32.mrb[0].mxu0
    %v890 = vadd.f32 %v805, %v889
    %v891 = vpop.f32.mrb[0].mxu0
    %v892 = vpop.f32.mrb[0].mxu0
    %v893 = vadd.f32 %v805, %v892
    %v894 = vpop.f32.mrb[0].mxu0
    %895 = vdwg.mxu0
    %v896 = vpack.c.bf16 %v893, %v890
    %v897 = vmul.bf16 %v896, 1036860877
    %v898 = vmax.bf16 %v896, %v897
    %v899 = vld [vmem:[%s13] sm:$0xf]
    %v900 = vld [vmem:[%s13 + $0x4] sm:$0xf]
    %v901 = vld [vmem:[%s13 + $0x8] sm:$0xf]
    %v902 = vld [vmem:[%s13 + $0xc] sm:$0xf]
    %v903 = vld [vmem:[%s13 + $0x10] sm:$0xf]
    %v904 = vld [vmem:[%s13 + $0x14] sm:$0xf]
    %v905 = vld [vmem:[%s13 + $0x18] sm:$0xf]
    %v906 = vld [vmem:[%s13 + $0x1c] sm:$0xf]
    %v907 = vld [vmem:[%s13 + $0x20] sm:$0xf]
    %v908 = vld [vmem:[%s13 + $0x24] sm:$0xf]
    %v909 = vld [vmem:[%s13 + $0x28] sm:$0xf]
    %v910 = vld [vmem:[%s13 + $0x2c] sm:$0xf]
    %v911 = vld [vmem:[%s13 + $0x30] sm:$0xf]
    %v912 = vld [vmem:[%s13 + $0x34] sm:$0xf]
    %v913 = vld [vmem:[%s13 + $0x38] sm:$0xf]
    %v914 = vld [vmem:[%s13 + $0x3c] sm:$0xf]
    %v915 = vld [vmem:[%s14] sm:$0x1]
    %v917 = vlaneseq
    %v918 = vshrl.u32 %v917, 7
    %v919 = vsub.s32 0, %v918
    %v920 = vrot.slane %v915, %v919
    %v938 = vunpack.c.l.b16 %v899
    %v939 = vunpack.c.l.b16 %v900
    %v940 = vunpack.c.l.b16 %v901
    %v941 = vunpack.c.l.b16 %v902
    %v942 = vunpack.c.l.b16 %v903
    %v943 = vunpack.c.l.b16 %v904
    %v944 = vunpack.c.l.b16 %v905
    %v945 = vunpack.c.l.b16 %v906
    %v946 = vunpack.c.l.b16 %v907
    %v947 = vunpack.c.l.b16 %v908
    %v948 = vunpack.c.l.b16 %v909
    %v949 = vunpack.c.l.b16 %v910
    %v950 = vunpack.c.l.b16 %v911
    %v951 = vunpack.c.l.b16 %v912
    %v952 = vunpack.c.l.b16 %v913
    %v953 = vunpack.c.l.b16 %v914
    %v954 = vpack.c.b16 %v939, %v938
    %v955 = vpack.c.b16 %v941, %v940
    %v956 = vpack.c.b16 %v943, %v942
    %v957 = vpack.c.b16 %v945, %v944
    %v958 = vpack.c.b16 %v947, %v946
    %v959 = vpack.c.b16 %v949, %v948
    %v960 = vpack.c.b16 %v951, %v950
    %v961 = vpack.c.b16 %v953, %v952
    %970 = vmatprep.subr.bf16.mxu0 0
    %971 = vmatpush1.bf16.msra.mxu0 %v954
    %972 = vmatprep.subr.bf16.mxu0 0
    %973 = vmatpush1.bf16.msra.mxu0 %v955
    %974 = vmatprep.subr.bf16.mxu0 0
    %975 = vmatpush1.bf16.msra.mxu0 %v956
    %976 = vmatprep.subr.bf16.mxu0 0
    %977 = vmatpush1.bf16.msra.mxu0 %v957
    %978 = vmatprep.subr.bf16.mxu0 0
    %979 = vmatpush1.bf16.msra.mxu0 %v958
    %980 = vmatprep.subr.bf16.mxu0 0
    %981 = vmatpush1.bf16.msra.mxu0 %v959
    %982 = vmatprep.subr.bf16.mxu0 0
    %983 = vmatpush1.bf16.msra.mxu0 %v960
    %984 = vmatprep.subr.bf16.mxu0 0
    %985 = vmatpush1.bf16.msra.mxu0 %v961
    %986 = vmatprep.subr.bf16.mxu0 0
    %987 = vmatpush1.bf16.msra.mxu0 0
    %988 = vmatprep.subr.bf16.mxu0 0
    %989 = vmatpush1.bf16.msra.mxu0 0
    %990 = vmatprep.subr.bf16.mxu0 0
    %991 = vmatpush1.bf16.msra.mxu0 0
    %992 = vmatprep.subr.bf16.mxu0 0
    %993 = vmatpush1.bf16.msra.mxu0 0
    %994 = vmatprep.subr.bf16.mxu0 0
    %995 = vmatpush1.bf16.msra.mxu0 0
    %996 = vmatprep.subr.bf16.mxu0 0
    %997 = vmatpush1.bf16.msra.mxu0 0
    %998 = vmatprep.subr.bf16.mxu0 0
    %999 = vmatpush1.bf16.msra.mxu0 0
    %1000 = vmatprep.subr.bf16.mxu0 0
    %1001 = vmatpush1.bf16.msra.mxu0 0
    %1002 = vmatprep.mubr.bf16.mxu0 0
    %1003 = vmatmul.mubr.bf16.gmra.mrb[0].mxu0 %v898
    %v1004 = vpop.f32.mrb[0].mxu0
    %v1005 = vadd.f32 %v920, %v1004
    %v1006 = vpop.f32.mrb[0].mxu0
    %v1007 = vpop.f32.mrb[0].mxu0
    %v1008 = vadd.f32 %v920, %v1007
    %v1009 = vpop.f32.mrb[0].mxu0
    %1010 = vdwg.mxu0
    %vm1011 = vcmask 80896
    %1012 = vst.msk [vmem:[#allocation14] sm:$0xff] %vm1011, %v1005
    %1013 = vst.msk [vmem:[#allocation14 + $0x8] sm:$0xff] %vm1011, %v1008
    // Predicated region
    $region90: #{tpu_custom_call.1} parent=1 // pred_check
      _
    $region91: #{tpu_custom_call.1} parent=1 // pred_check_branch
      %1015 = sbr.rel (0) target = $region93
    $region92: #{tpu_custom_call.1} parent=1 // pred_region
      %s1017 = ssub.s32 256, 256
      %1018 = vsyncadd [#allocation4], %s1017
      %s1019 = sshll.u32 [#allocation14], 4
      %s1020 = int_to_ptr.vmem [resolvable:$true] %s1019
      %1025 = dma.vmem_to_hbm [thread:$0]  %s1020, 256, %s15, [#allocation4], 128, 128, 8
    $region93: #{tpu_custom_call.1} parent=1 // pred_fallthru
      _
    // Predicated region
    $region94: #{tpu_custom_call.1} parent=1 // pred_check
      _
    $region95: #{tpu_custom_call.1} parent=1 // pred_check_branch
      %1027 = sbr.rel (0) target = $region97
    $region96: #{tpu_custom_call.1} parent=1 // pred_region
      %1028 = dma.done [#allocation4], 256
    $region97: #{tpu_custom_call.1} parent=1 // pred_fallthru
      _
    %1029 = vsyncpa [#allocation3], 1
    %1030 = vsyncpa [#allocation6], 1
    %1031 = vsyncpa [#allocation9], 1
    %1032 = vsyncpa [#allocation12], 1
    %1033 = vsyncpa [#allocation4], 1

</llo_original>
